<compile_context>
chip_gen: v6e
topology: v6e:2x2x1
jax: 0.10.0
libtpu: 0.0.40
codegen_flags: <defaults>
</compile_context>

<pallas_src>
import functools

import jax
import jax.numpy as jnp
from jax.experimental import pallas as pl
from jax.experimental.pallas import tpu as pltpu

IN_DIM = 28 * 28          # 784 (equals full array dim, so a legal lane extent)
H1_PAD = 256              # 200 -> 256
H2_PAD = 128              # 100 -> 128
OUT_PAD = 128             # 10  -> 128 (lane-dense output)
OUT_DIM = 10
TILE_N_MAX = 512          # batch tile: ~0.8 MB bf16, x2 buffers; leaves >=2 tiles for megacore


def _round_up(x, m):
    return (x + m - 1) // m * m


def _pad2d(a, rows, cols):
    r, c = a.shape
    return jnp.pad(a, ((0, rows - r), (0, cols - c)))


def _mlp_kernel(x_ref, w1_ref, b1_ref, w2_ref, b2_ref, w3_ref, b3_ref, o_ref):
    # One batch tile per grid step; weights/biases are VMEM-resident across steps.
    x = x_ref[...]                                                        # bf16 (tile_n, 784)
    h1 = jnp.dot(x, w1_ref[...], preferred_element_type=jnp.float32)      # MXU, f32 accum
    h1 = jnp.maximum(h1 + b1_ref[...], 0.0).astype(w2_ref.dtype)          # f32 epilogue -> bf16
    h2 = jnp.dot(h1, w2_ref[...], preferred_element_type=jnp.float32)
    h2 = jnp.maximum(h2 + b2_ref[...], 0.0).astype(w3_ref.dtype)
    logits = jnp.dot(h2, w3_ref[...], preferred_element_type=jnp.float32) + b3_ref[...]
    o_ref[...] = logits.astype(o_ref.dtype)                               # 128-wide dense vst


def _prep_params(params, compute_dtype=jnp.bfloat16):
    """Zero-pad weights/biases to 128-lane multiples; weights -> bf16, biases -> f32."""
    w1, b1, w2, b2, w3, b3 = params
    w1p = _pad2d(w1, IN_DIM, H1_PAD).astype(compute_dtype)
    b1p = _pad2d(b1, 1, H1_PAD).astype(jnp.float32)
    w2p = _pad2d(w2, H1_PAD, H2_PAD).astype(compute_dtype)
    b2p = _pad2d(b2, 1, H2_PAD).astype(jnp.float32)
    w3p = _pad2d(w3, H2_PAD, OUT_PAD).astype(compute_dtype)
    b3p = _pad2d(b3, 1, OUT_PAD).astype(jnp.float32)
    return w1p, b1p, w2p, b2p, w3p, b3p


@functools.partial(jax.jit, static_argnames=("tile_n_max",))
def simple_nn_forward(x, params, *, tile_n_max=TILE_N_MAX):
    """x: (N, 1, 28, 28) or (N, 28, 28) float32. Returns (N, 10) float32 logits."""
    w1, b1, w2, b2, w3, b3 = _prep_params(params)

    n = x.shape[0]
    x_flat = x.reshape(n, -1).astype(jnp.bfloat16)   # nn.Flatten (row-major, C=1)
    assert x_flat.shape[1] == IN_DIM

    tile_n = min(tile_n_max, _round_up(n, 8))        # sublane-aligned batch tile
    n_pad = _round_up(n, tile_n)
    if n_pad != n:
        x_flat = jnp.pad(x_flat, ((0, n_pad - n), (0, 0)))
    grid = (n_pad // tile_n,)

    resident = lambda i: (0, 0)   # weights/biases: same block every grid step (stay in VMEM)

    flops = 2 * n_pad * (IN_DIM * H1_PAD + H1_PAD * H2_PAD + H2_PAD * OUT_PAD)
    bytes_accessed = (
        x_flat.size * 2
        + (w1.size + w2.size + w3.size) * 2
        + (b1.size + b2.size + b3.size) * 4
        + n_pad * OUT_PAD * 4
    )

    out_padded = pl.pallas_call(
        _mlp_kernel,
        out_shape=jax.ShapeDtypeStruct((n_pad, OUT_PAD), jnp.float32),
        grid=grid,
        in_specs=[
            pl.BlockSpec((tile_n, IN_DIM), lambda i: (i, 0)),   # streamed batch tile
            pl.BlockSpec((IN_DIM, H1_PAD), resident),
            pl.BlockSpec((1, H1_PAD), resident),
            pl.BlockSpec((H1_PAD, H2_PAD), resident),
            pl.BlockSpec((1, H2_PAD), resident),
            pl.BlockSpec((H2_PAD, OUT_PAD), resident),
            pl.BlockSpec((1, OUT_PAD), resident),
        ],
        out_specs=pl.BlockSpec((tile_n, OUT_PAD), lambda i: (i, 0)),
        compiler_params=pltpu.CompilerParams(
            dimension_semantics=("parallel",),        # batch tiles shard across v7x's 2 TCs
            vmem_limit_bytes=48 * 1024 * 1024,
        ),
        cost_estimate=pl.CostEstimate(
            flops=flops, transcendentals=0, bytes_accessed=bytes_accessed
        ),
    )(x_flat, w1, b1, w2, b2, w3, b3)

    return out_padded[:n, :OUT_DIM]


def init_params(key):
    """Deterministic init matching PyTorch nn.Linear shapes.

    PyTorch stores weights as (out, in) and computes x @ W.T + b; here we keep the
    transposed (in, out) layout so the kernel does x @ W + b directly.  Biases are
    2D (1, out) for clean TPU broadcasting.
    """
    dims = [(IN_DIM, 200), (200, 100), (100, OUT_DIM)]
    params = []
    for i, (fan_in, fan_out) in enumerate(dims):
        kw, kb, key = jax.random.split(jax.random.fold_in(key, i), 3)
        bound = 1.0 / jnp.sqrt(fan_in)  # same uniform bound PyTorch uses
        w = jax.random.uniform(kw, (fan_in, fan_out), jnp.float32, -bound, bound)
        b = jax.random.uniform(kb, (1, fan_out), jnp.float32, -bound, bound)
        params += [w, b]
    return tuple(params)


def _reference_forward(x, params):
    w1, b1, w2, b2, w3, b3 = params
    h = x.reshape(x.shape[0], -1)
    h = jnp.maximum(h @ w1 + b1, 0.0)
    h = jnp.maximum(h @ w2 + b2, 0.0)
    return h @ w3 + b3


if __name__ == "__main__":
    key = jax.random.PRNGKey(0)
    params = init_params(key)
    x = jax.random.normal(jax.random.fold_in(key, 99), (8, 1, 28, 28), jnp.float32)

    logits = jax.block_until_ready(simple_nn_forward(x, params))
    ref = jax.block_until_ready(_reference_forward(x, params))

    assert logits.shape == (8, 10), logits.shape
    # bf16 inputs/weights with f32 accumulation: allow small quantization error vs f32 ref.
    assert jnp.allclose(logits, ref, atol=5e-2, rtol=5e-2), float(
        jnp.max(jnp.abs(logits - ref))
    )
    print("KERNEL_OK")
</pallas_src>

<mosaic_0001>
module attributes {stable_mosaic.version = 11 : i64} {
  func.func @_mlp_kernel(%arg0: i32, %arg1: memref<8x784xbf16, #tpu.memory_space<vmem>>, %arg2: memref<784x256xbf16, #tpu.memory_space<vmem>>, %arg3: memref<1x256xf32, #tpu.memory_space<vmem>>, %arg4: memref<256x128xbf16, #tpu.memory_space<vmem>>, %arg5: memref<1x128xf32, #tpu.memory_space<vmem>>, %arg6: memref<128x128xbf16, #tpu.memory_space<vmem>>, %arg7: memref<1x128xf32, #tpu.memory_space<vmem>>, %arg8: memref<8x128xf32, #tpu.memory_space<vmem>>) attributes {dimension_semantics = [#tpu.dimension_semantics<parallel>], iteration_bounds = array<i64: 1>, scalar_prefetch = 0 : i64, scratch_operands = 0 : i64, tpu.core_type = #tpu.core_type<tc>, window_params = [{transform_indices = @transform_0, window_bounds = array<i64: 8, 784>}, {pipeline_mode = #tpu.pipeline_mode<synchronous>, transform_indices = @transform_1, window_bounds = array<i64: 784, 256>}, {pipeline_mode = #tpu.pipeline_mode<synchronous>, transform_indices = @transform_2, window_bounds = array<i64: 1, 256>}, {pipeline_mode = #tpu.pipeline_mode<synchronous>, transform_indices = @transform_3, window_bounds = array<i64: 256, 128>}, {pipeline_mode = #tpu.pipeline_mode<synchronous>, transform_indices = @transform_4, window_bounds = array<i64: 1, 128>}, {pipeline_mode = #tpu.pipeline_mode<synchronous>, transform_indices = @transform_5, window_bounds = array<i64: 128, 128>}, {pipeline_mode = #tpu.pipeline_mode<synchronous>, transform_indices = @transform_6, window_bounds = array<i64: 1, 128>}, {transform_indices = @transform_7, window_bounds = array<i64: 8, 128>}]} {
    %c0 = arith.constant 0 : index
    %c0_0 = arith.constant 0 : index
    %0 = vector.load %arg1[%c0, %c0_0] : memref<8x784xbf16, #tpu.memory_space<vmem>>, vector<8x784xbf16>
    %c0_1 = arith.constant 0 : index
    %c0_2 = arith.constant 0 : index
    %1 = vector.load %arg2[%c0_1, %c0_2] : memref<784x256xbf16, #tpu.memory_space<vmem>>, vector<784x256xbf16>
    %cst = arith.constant dense<0.000000e+00> : vector<8x256xf32>
    %2 = tpu.matmul %0, %1, %cst {dimension_numbers = #tpu.dot_dimension_numbers<[1], [0], [0], [1], [0, 0, 1, 1], [], []>} : vector<8x784xbf16>, vector<784x256xbf16>, vector<8x256xf32> -> vector<8x256xf32>
    %c0_3 = arith.constant 0 : index
    %c0_4 = arith.constant 0 : index
    %3 = vector.load %arg3[%c0_3, %c0_4] : memref<1x256xf32, #tpu.memory_space<vmem>>, vector<1x256xf32>
    %4 = vector.broadcast %3 : vector<1x256xf32> to vector<8x256xf32>
    %5 = arith.addf %2, %4 : vector<8x256xf32>
    %cst_5 = arith.constant 0.000000e+00 : f32
    %6 = vector.broadcast %cst_5 : f32 to vector<8x256xf32>
    %7 = arith.maximumf %5, %6 : vector<8x256xf32>
    %8 = arith.truncf %7 : vector<8x256xf32> to vector<8x256xbf16>
    %c0_6 = arith.constant 0 : index
    %c0_7 = arith.constant 0 : index
    %9 = vector.load %arg4[%c0_6, %c0_7] : memref<256x128xbf16, #tpu.memory_space<vmem>>, vector<256x128xbf16>
    %cst_8 = arith.constant dense<0.000000e+00> : vector<8x128xf32>
    %10 = tpu.matmul %8, %9, %cst_8 {dimension_numbers = #tpu.dot_dimension_numbers<[1], [0], [0], [1], [0, 0, 1, 1], [], []>} : vector<8x256xbf16>, vector<256x128xbf16>, vector<8x128xf32> -> vector<8x128xf32>
    %c0_9 = arith.constant 0 : index
    %c0_10 = arith.constant 0 : index
    %11 = vector.load %arg5[%c0_9, %c0_10] : memref<1x128xf32, #tpu.memory_space<vmem>>, vector<1x128xf32>
    %12 = vector.broadcast %11 : vector<1x128xf32> to vector<8x128xf32>
    %13 = arith.addf %10, %12 : vector<8x128xf32>
    %cst_11 = arith.constant 0.000000e+00 : f32
    %14 = vector.broadcast %cst_11 : f32 to vector<8x128xf32>
    %15 = arith.maximumf %13, %14 : vector<8x128xf32>
    %16 = arith.truncf %15 : vector<8x128xf32> to vector<8x128xbf16>
    %c0_12 = arith.constant 0 : index
    %c0_13 = arith.constant 0 : index
    %17 = vector.load %arg6[%c0_12, %c0_13] : memref<128x128xbf16, #tpu.memory_space<vmem>>, vector<128x128xbf16>
    %cst_14 = arith.constant dense<0.000000e+00> : vector<8x128xf32>
    %18 = tpu.matmul %16, %17, %cst_14 {dimension_numbers = #tpu.dot_dimension_numbers<[1], [0], [0], [1], [0, 0, 1, 1], [], []>} : vector<8x128xbf16>, vector<128x128xbf16>, vector<8x128xf32> -> vector<8x128xf32>
    %c0_15 = arith.constant 0 : index
    %c0_16 = arith.constant 0 : index
    %19 = vector.load %arg7[%c0_15, %c0_16] : memref<1x128xf32, #tpu.memory_space<vmem>>, vector<1x128xf32>
    %20 = vector.broadcast %19 : vector<1x128xf32> to vector<8x128xf32>
    %21 = arith.addf %18, %20 : vector<8x128xf32>
    %c0_17 = arith.constant 0 : index
    %c0_18 = arith.constant 0 : index
    %22 = vector.load %arg8[%c0_17, %c0_18] : memref<8x128xf32, #tpu.memory_space<vmem>>, vector<8x128xf32>
    tpu.vector_store %arg8[%c0_17, %c0_18], %21 {strides = array<i32>} : memref<8x128xf32, #tpu.memory_space<vmem>>, vector<8x128xf32>,
    return
  }
  func.func @transform_0(%arg0: i32) -> (i32, i32) {
    %c0_i32 = arith.constant 0 : i32
    %c0_i32_0 = arith.constant 0 : i32
    return %arg0, %c0_i32 : i32, i32
  }
  func.func @transform_1(%arg0: i32) -> (i32, i32) {
    %c0_i32 = arith.constant 0 : i32
    %c0_i32_0 = arith.constant 0 : i32
    %c0_i32_1 = arith.constant 0 : i32
    return %c0_i32, %c0_i32_0 : i32, i32
  }
  func.func @transform_2(%arg0: i32) -> (i32, i32) {
    %c0_i32 = arith.constant 0 : i32
    %c0_i32_0 = arith.constant 0 : i32
    %c0_i32_1 = arith.constant 0 : i32
    return %c0_i32, %c0_i32_0 : i32, i32
  }
  func.func @transform_3(%arg0: i32) -> (i32, i32) {
    %c0_i32 = arith.constant 0 : i32
    %c0_i32_0 = arith.constant 0 : i32
    %c0_i32_1 = arith.constant 0 : i32
    return %c0_i32, %c0_i32_0 : i32, i32
  }
  func.func @transform_4(%arg0: i32) -> (i32, i32) {
    %c0_i32 = arith.constant 0 : i32
    %c0_i32_0 = arith.constant 0 : i32
    %c0_i32_1 = arith.constant 0 : i32
    return %c0_i32, %c0_i32_0 : i32, i32
  }
  func.func @transform_5(%arg0: i32) -> (i32, i32) {
    %c0_i32 = arith.constant 0 : i32
    %c0_i32_0 = arith.constant 0 : i32
    %c0_i32_1 = arith.constant 0 : i32
    return %c0_i32, %c0_i32_0 : i32, i32
  }
  func.func @transform_6(%arg0: i32) -> (i32, i32) {
    %c0_i32 = arith.constant 0 : i32
    %c0_i32_0 = arith.constant 0 : i32
    %c0_i32_1 = arith.constant 0 : i32
    return %c0_i32, %c0_i32_0 : i32, i32
  }
  func.func @transform_7(%arg0: i32) -> (i32, i32) {
    %c0_i32 = arith.constant 0 : i32
    %c0_i32_0 = arith.constant 0 : i32
    return %arg0, %c0_i32 : i32, i32
  }
}

</mosaic_0001>

<llo_original>
// kernel: simple_nn_forward.1
$region0: #{simple_nn_forward.1}
  #allocation0 [shape = 'u32[]', space=smem, size = 0x4, offset = 0x4, fixed_abs, tag = 'smem constant byte address 0x4 - core index']
  #allocation1 [shape = 'u32[144,128]{1,0:T(1,128)}', space=vmem, size = 0x12000, scoped, tag = 'internal scratch']
  %s0 = inlined_call_operand.vmem [shape: bf16[8,784], index: 0, kind: input, shape index: {}]
  %s1 = inlined_call_operand.vmem [shape: bf16[784,256], index: 1, kind: input, shape index: {}]
  %s2 = inlined_call_operand.vmem [shape: f32[1,256], index: 2, kind: input, shape index: {}]
  %s3 = inlined_call_operand.vmem [shape: bf16[256,128], index: 3, kind: input, shape index: {}]
  %s4 = inlined_call_operand.vmem [shape: f32[1,128], index: 4, kind: input, shape index: {}]
  %s5 = inlined_call_operand.vmem [shape: bf16[128,128], index: 5, kind: input, shape index: {}]
  %s6 = inlined_call_operand.vmem [shape: f32[1,128], index: 6, kind: input, shape index: {}]
  %s7 = inlined_call_operand.hbm [shape: f32[8,128], index: 7, kind: output, shape index: {}]
  %s8 = sld [smem:[#allocation0]]
  $region38: #{simple_nn_forward.1} parent=0
    _
  %s10 = ssub.s32 1, %s8
  %s11 = scalar_select 0, %s10, %s8
  $region1: #{simple_nn_forward.1} parent=0
    #allocation2 [shape = 'u8[4096]{0}', space=vmem, size = 0x1000, scoped, tag = 'output window, operand 0, single buffered']
    #allocation3 [shape = 's32[1]{0}', space=sflag, size = 0x4, scoped, tag = 'scoped memory for simple_nn_forward.1']
    %12 = vsyncpa [#allocation3], 0
    // Predicated region
    $region2: #{simple_nn_forward.1} parent=1 // pred_check
      _
    $region3: #{simple_nn_forward.1} parent=1 // pred_check_branch
      %14 = sbr.rel (0) target = $region5
    $region4: #{simple_nn_forward.1} parent=1 // pred_region
      _
    $region5: #{simple_nn_forward.1} parent=1 // pred_fallthru
      _
    // Predicated region
    $region6: #{simple_nn_forward.1} parent=1 // pred_check
      _
    $region7: #{simple_nn_forward.1} parent=1 // pred_check_branch
      %16 = sbr.rel (0) target = $region9
    $region8: #{simple_nn_forward.1} parent=1 // pred_region
      _
    $region9: #{simple_nn_forward.1} parent=1 // pred_fallthru
      _
    // Predicated region
    $region10: #{simple_nn_forward.1} parent=1 // pred_check
      _
    $region11: #{simple_nn_forward.1} parent=1 // pred_check_branch
      %18 = sbr.rel (0) target = $region13
    $region12: #{simple_nn_forward.1} parent=1 // pred_region
      _
    $region13: #{simple_nn_forward.1} parent=1 // pred_fallthru
      _
    // Predicated region
    $region14: #{simple_nn_forward.1} parent=1 // pred_check
      _
    $region15: #{simple_nn_forward.1} parent=1 // pred_check_branch
      %20 = sbr.rel (0) target = $region17
    $region16: #{simple_nn_forward.1} parent=1 // pred_region
      _
    $region17: #{simple_nn_forward.1} parent=1 // pred_fallthru
      _
    // Predicated region
    $region18: #{simple_nn_forward.1} parent=1 // pred_check
      _
    $region19: #{simple_nn_forward.1} parent=1 // pred_check_branch
      %22 = sbr.rel (0) target = $region21
    $region20: #{simple_nn_forward.1} parent=1 // pred_region
      _
    $region21: #{simple_nn_forward.1} parent=1 // pred_fallthru
      _
    // Predicated region
    $region22: #{simple_nn_forward.1} parent=1 // pred_check
      _
    $region23: #{simple_nn_forward.1} parent=1 // pred_check_branch
      %24 = sbr.rel (0) target = $region25
    $region24: #{simple_nn_forward.1} parent=1 // pred_region
      _
    $region25: #{simple_nn_forward.1} parent=1 // pred_fallthru
      _
    // Predicated region
    $region26: #{simple_nn_forward.1} parent=1 // pred_check
      _
    $region27: #{simple_nn_forward.1} parent=1 // pred_check_branch
      %26 = sbr.rel (0) target = $region29
    $region28: #{simple_nn_forward.1} parent=1 // pred_region
      _
    $region29: #{simple_nn_forward.1} parent=1 // pred_fallthru
      _
    %v28 = vld [vmem:[%s0] sm:$0xff]
    %v29 = vld [vmem:[%s0 + $0x8] sm:$0xff]
    %v30 = vld [vmem:[%s0 + $0x10] sm:$0xff]
    %v31 = vld [vmem:[%s0 + $0x18] sm:$0xf]
    %v32 = vld [vmem:[%s1] sm:$0xff]
    %v33 = vld [vmem:[%s1 + $0x8] sm:$0xff]
    %v34 = vld [vmem:[%s1 + $0x10] sm:$0xff]
    %v35 = vld [vmem:[%s1 + $0x18] sm:$0xff]
    %v36 = vld [vmem:[%s1 + $0x20] sm:$0xff]
    %v37 = vld [vmem:[%s1 + $0x28] sm:$0xff]
    %v38 = vld [vmem:[%s1 + $0x30] sm:$0xff]
    %v39 = vld [vmem:[%s1 + $0x38] sm:$0xff]
    %v40 = vld [vmem:[%s1 + $0x40] sm:$0xff]
    %v41 = vld [vmem:[%s1 + $0x48] sm:$0xff]
    %v42 = vld [vmem:[%s1 + $0x50] sm:$0xff]
    %v43 = vld [vmem:[%s1 + $0x58] sm:$0xff]
    %v44 = vld [vmem:[%s1 + $0x60] sm:$0xff]
    %v45 = vld [vmem:[%s1 + $0x68] sm:$0xff]
    %v46 = vld [vmem:[%s1 + $0x70] sm:$0xff]
    %v47 = vld [vmem:[%s1 + $0x78] sm:$0xff]
    %v48 = vld [vmem:[%s1 + $0x80] sm:$0xff]
    %v49 = vld [vmem:[%s1 + $0x88] sm:$0xff]
    %v50 = vld [vmem:[%s1 + $0x90] sm:$0xff]
    %v51 = vld [vmem:[%s1 + $0x98] sm:$0xff]
    %v52 = vld [vmem:[%s1 + $0xa0] sm:$0xff]
    %v53 = vld [vmem:[%s1 + $0xa8] sm:$0xff]
    %v54 = vld [vmem:[%s1 + $0xb0] sm:$0xff]
    %v55 = vld [vmem:[%s1 + $0xb8] sm:$0xff]
    %v56 = vld [vmem:[%s1 + $0xc0] sm:$0xff]
    %v57 = vld [vmem:[%s1 + $0xc8] sm:$0xff]
    %v58 = vld [vmem:[%s1 + $0xd0] sm:$0xff]
    %v59 = vld [vmem:[%s1 + $0xd8] sm:$0xff]
    %v60 = vld [vmem:[%s1 + $0xe0] sm:$0xff]
    %v61 = vld [vmem:[%s1 + $0xe8] sm:$0xff]
    %v62 = vld [vmem:[%s1 + $0xf0] sm:$0xff]
    %v63 = vld [vmem:[%s1 + $0xf8] sm:$0xff]
    %v64 = vld [vmem:[%s1 + $0x100] sm:$0xff]
    %v65 = vld [vmem:[%s1 + $0x108] sm:$0xff]
    %v66 = vld [vmem:[%s1 + $0x110] sm:$0xff]
    %v67 = vld [vmem:[%s1 + $0x118] sm:$0xff]
    %v68 = vld [vmem:[%s1 + $0x120] sm:$0xff]
    %v69 = vld [vmem:[%s1 + $0x128] sm:$0xff]
    %v70 = vld [vmem:[%s1 + $0x130] sm:$0xff]
    %v71 = vld [vmem:[%s1 + $0x138] sm:$0xff]
    %v72 = vld [vmem:[%s1 + $0x140] sm:$0xff]
    %v73 = vld [vmem:[%s1 + $0x148] sm:$0xff]
    %v74 = vld [vmem:[%s1 + $0x150] sm:$0xff]
    %v75 = vld [vmem:[%s1 + $0x158] sm:$0xff]
    %v76 = vld [vmem:[%s1 + $0x160] sm:$0xff]
    %v77 = vld [vmem:[%s1 + $0x168] sm:$0xff]
    %v78 = vld [vmem:[%s1 + $0x170] sm:$0xff]
    %v79 = vld [vmem:[%s1 + $0x178] sm:$0xff]
    %v80 = vld [vmem:[%s1 + $0x180] sm:$0xff]
    %v81 = vld [vmem:[%s1 + $0x188] sm:$0xff]
    %v82 = vld [vmem:[%s1 + $0x190] sm:$0xff]
    %v83 = vld [vmem:[%s1 + $0x198] sm:$0xff]
    %v84 = vld [vmem:[%s1 + $0x1a0] sm:$0xff]
    %v85 = vld [vmem:[%s1 + $0x1a8] sm:$0xff]
    %v86 = vld [vmem:[%s1 + $0x1b0] sm:$0xff]
    %v87 = vld [vmem:[%s1 + $0x1b8] sm:$0xff]
    %v88 = vld [vmem:[%s1 + $0x1c0] sm:$0xff]
    %v89 = vld [vmem:[%s1 + $0x1c8] sm:$0xff]
    %v90 = vld [vmem:[%s1 + $0x1d0] sm:$0xff]
    %v91 = vld [vmem:[%s1 + $0x1d8] sm:$0xff]
    %v92 = vld [vmem:[%s1 + $0x1e0] sm:$0xff]
    %v93 = vld [vmem:[%s1 + $0x1e8] sm:$0xff]
    %v94 = vld [vmem:[%s1 + $0x1f0] sm:$0xff]
    %v95 = vld [vmem:[%s1 + $0x1f8] sm:$0xff]
    %v96 = vld [vmem:[%s1 + $0x200] sm:$0xff]
    %v97 = vld [vmem:[%s1 + $0x208] sm:$0xff]
    %v98 = vld [vmem:[%s1 + $0x210] sm:$0xff]
    %v99 = vld [vmem:[%s1 + $0x218] sm:$0xff]
    %v100 = vld [vmem:[%s1 + $0x220] sm:$0xff]
    %v101 = vld [vmem:[%s1 + $0x228] sm:$0xff]
    %v102 = vld [vmem:[%s1 + $0x230] sm:$0xff]
    %v103 = vld [vmem:[%s1 + $0x238] sm:$0xff]
    %v104 = vld [vmem:[%s1 + $0x240] sm:$0xff]
    %v105 = vld [vmem:[%s1 + $0x248] sm:$0xff]
    %v106 = vld [vmem:[%s1 + $0x250] sm:$0xff]
    %v107 = vld [vmem:[%s1 + $0x258] sm:$0xff]
    %v108 = vld [vmem:[%s1 + $0x260] sm:$0xff]
    %v109 = vld [vmem:[%s1 + $0x268] sm:$0xff]
    %v110 = vld [vmem:[%s1 + $0x270] sm:$0xff]
    %v111 = vld [vmem:[%s1 + $0x278] sm:$0xff]
    %v112 = vld [vmem:[%s1 + $0x280] sm:$0xff]
    %v113 = vld [vmem:[%s1 + $0x288] sm:$0xff]
    %v114 = vld [vmem:[%s1 + $0x290] sm:$0xff]
    %v115 = vld [vmem:[%s1 + $0x298] sm:$0xff]
    %v116 = vld [vmem:[%s1 + $0x2a0] sm:$0xff]
    %v117 = vld [vmem:[%s1 + $0x2a8] sm:$0xff]
    %v118 = vld [vmem:[%s1 + $0x2b0] sm:$0xff]
    %v119 = vld [vmem:[%s1 + $0x2b8] sm:$0xff]
    %v120 = vld [vmem:[%s1 + $0x2c0] sm:$0xff]
    %v121 = vld [vmem:[%s1 + $0x2c8] sm:$0xff]
    %v122 = vld [vmem:[%s1 + $0x2d0] sm:$0xff]
    %v123 = vld [vmem:[%s1 + $0x2d8] sm:$0xff]
    %v124 = vld [vmem:[%s1 + $0x2e0] sm:$0xff]
    %v125 = vld [vmem:[%s1 + $0x2e8] sm:$0xff]
    %v126 = vld [vmem:[%s1 + $0x2f0] sm:$0xff]
    %v127 = vld [vmem:[%s1 + $0x2f8] sm:$0xff]
    %v128 = vld [vmem:[%s1 + $0x300] sm:$0xff]
    %v129 = vld [vmem:[%s1 + $0x308] sm:$0xff]
    %v130 = vld [vmem:[%s2] sm:$0x3]
    %v132 = vlaneseq
    %v133 = vshrl.u32 %v132, 7
    %v134 = vsub.s32 0, %v133
    %v135 = vrot.slane %v130, %v134
    %v136 = vlaneseq
    %v137 = vshrl.u32 %v136, 7
    %v138 = vsub.s32 1, %v137
    %v139 = vrot.slane %v130, %v138
    %v146 = vunpack.c.l.b16 %v28
    %v147 = vunpack.c.h.b16 %v28
    %v148 = vunpack.c.l.b16 %v29
    %v149 = vunpack.c.h.b16 %v29
    %v150 = vunpack.c.l.b16 %v30
    %v151 = vunpack.c.h.b16 %v30
    %v152 = vunpack.c.l.b16 %v31
    %v153 = vpack.c.b16 %v146, %v146
    %v154 = vpack.c.b16 %v147, %v147
    %v155 = vpack.c.b16 %v148, %v148
    %v156 = vpack.c.b16 %v149, %v149
    %v157 = vpack.c.b16 %v150, %v150
    %v158 = vpack.c.b16 %v151, %v151
    %v159 = vpack.c.b16 %v152, %v152
    %v264 = vunpack.c.l.b16 %v32
    %v265 = vunpack.c.h.b16 %v32
    %v266 = vunpack.c.l.b16 %v33
    %v267 = vunpack.c.h.b16 %v33
    %v268 = vunpack.c.l.b16 %v34
    %v269 = vunpack.c.h.b16 %v34
    %v270 = vunpack.c.l.b16 %v35
    %v271 = vunpack.c.h.b16 %v35
    %v272 = vunpack.c.l.b16 %v36
    %v273 = vunpack.c.h.b16 %v36
    %v274 = vunpack.c.l.b16 %v37
    %v275 = vunpack.c.h.b16 %v37
    %v276 = vunpack.c.l.b16 %v38
    %v277 = vunpack.c.h.b16 %v38
    %v278 = vunpack.c.l.b16 %v39
    %v279 = vunpack.c.h.b16 %v39
    %v280 = vunpack.c.l.b16 %v40
    %v281 = vunpack.c.h.b16 %v40
    %v282 = vunpack.c.l.b16 %v41
    %v283 = vunpack.c.h.b16 %v41
    %v284 = vunpack.c.l.b16 %v42
    %v285 = vunpack.c.h.b16 %v42
    %v286 = vunpack.c.l.b16 %v43
    %v287 = vunpack.c.h.b16 %v43
    %v288 = vunpack.c.l.b16 %v44
    %v289 = vunpack.c.h.b16 %v44
    %v290 = vunpack.c.l.b16 %v45
    %v291 = vunpack.c.h.b16 %v45
    %v292 = vunpack.c.l.b16 %v46
    %v293 = vunpack.c.h.b16 %v46
    %v294 = vunpack.c.l.b16 %v47
    %v295 = vunpack.c.h.b16 %v47
    %v296 = vunpack.c.l.b16 %v48
    %v297 = vunpack.c.h.b16 %v48
    %v298 = vunpack.c.l.b16 %v49
    %v299 = vunpack.c.h.b16 %v49
    %v300 = vunpack.c.l.b16 %v50
    %v301 = vunpack.c.h.b16 %v50
    %v302 = vunpack.c.l.b16 %v51
    %v303 = vunpack.c.h.b16 %v51
    %v304 = vunpack.c.l.b16 %v52
    %v305 = vunpack.c.h.b16 %v52
    %v306 = vunpack.c.l.b16 %v53
    %v307 = vunpack.c.h.b16 %v53
    %v308 = vunpack.c.l.b16 %v54
    %v309 = vunpack.c.h.b16 %v54
    %v310 = vunpack.c.l.b16 %v55
    %v311 = vunpack.c.h.b16 %v55
    %v312 = vunpack.c.l.b16 %v56
    %v313 = vunpack.c.h.b16 %v56
    %v314 = vunpack.c.l.b16 %v57
    %v315 = vunpack.c.h.b16 %v57
    %v316 = vunpack.c.l.b16 %v58
    %v317 = vunpack.c.h.b16 %v58
    %v318 = vunpack.c.l.b16 %v59
    %v319 = vunpack.c.h.b16 %v59
    %v320 = vunpack.c.l.b16 %v60
    %v321 = vunpack.c.h.b16 %v60
    %v322 = vunpack.c.l.b16 %v61
    %v323 = vunpack.c.h.b16 %v61
    %v324 = vunpack.c.l.b16 %v62
    %v325 = vunpack.c.h.b16 %v62
    %v326 = vunpack.c.l.b16 %v63
    %v327 = vunpack.c.h.b16 %v63
    %v328 = vunpack.c.l.b16 %v64
    %v329 = vunpack.c.h.b16 %v64
    %v330 = vunpack.c.l.b16 %v65
    %v331 = vunpack.c.h.b16 %v65
    %v332 = vunpack.c.l.b16 %v66
    %v333 = vunpack.c.h.b16 %v66
    %v334 = vunpack.c.l.b16 %v67
    %v335 = vunpack.c.h.b16 %v67
    %v336 = vunpack.c.l.b16 %v68
    %v337 = vunpack.c.h.b16 %v68
    %v338 = vunpack.c.l.b16 %v69
    %v339 = vunpack.c.h.b16 %v69
    %v340 = vunpack.c.l.b16 %v70
    %v341 = vunpack.c.h.b16 %v70
    %v342 = vunpack.c.l.b16 %v71
    %v343 = vunpack.c.h.b16 %v71
    %v344 = vunpack.c.l.b16 %v72
    %v345 = vunpack.c.h.b16 %v72
    %v346 = vunpack.c.l.b16 %v73
    %v347 = vunpack.c.h.b16 %v73
    %v348 = vunpack.c.l.b16 %v74
    %v349 = vunpack.c.h.b16 %v74
    %v350 = vunpack.c.l.b16 %v75
    %v351 = vunpack.c.h.b16 %v75
    %v352 = vunpack.c.l.b16 %v76
    %v353 = vunpack.c.h.b16 %v76
    %v354 = vunpack.c.l.b16 %v77
    %v355 = vunpack.c.h.b16 %v77
    %v356 = vunpack.c.l.b16 %v78
    %v357 = vunpack.c.h.b16 %v78
    %v358 = vunpack.c.l.b16 %v79
    %v359 = vunpack.c.h.b16 %v79
    %v360 = vunpack.c.l.b16 %v80
    %v361 = vunpack.c.h.b16 %v80
    %v362 = vunpack.c.l.b16 %v81
    %v363 = vunpack.c.h.b16 %v81
    %v364 = vunpack.c.l.b16 %v82
    %v365 = vunpack.c.h.b16 %v82
    %v366 = vunpack.c.l.b16 %v83
    %v367 = vunpack.c.h.b16 %v83
    %v368 = vunpack.c.l.b16 %v84
    %v369 = vunpack.c.h.b16 %v84
    %v370 = vunpack.c.l.b16 %v85
    %v371 = vunpack.c.h.b16 %v85
    %v372 = vunpack.c.l.b16 %v86
    %v373 = vunpack.c.h.b16 %v86
    %v374 = vunpack.c.l.b16 %v87
    %v375 = vunpack.c.h.b16 %v87
    %v376 = vunpack.c.l.b16 %v88
    %v377 = vunpack.c.h.b16 %v88
    %v378 = vunpack.c.l.b16 %v89
    %v379 = vunpack.c.h.b16 %v89
    %v380 = vunpack.c.l.b16 %v90
    %v381 = vunpack.c.h.b16 %v90
    %v382 = vunpack.c.l.b16 %v91
    %v383 = vunpack.c.h.b16 %v91
    %v384 = vunpack.c.l.b16 %v92
    %v385 = vunpack.c.h.b16 %v92
    %v386 = vunpack.c.l.b16 %v93
    %v387 = vunpack.c.h.b16 %v93
    %v388 = vunpack.c.l.b16 %v94
    %v389 = vunpack.c.h.b16 %v94
    %v390 = vunpack.c.l.b16 %v95
    %v391 = vunpack.c.h.b16 %v95
    %v392 = vunpack.c.l.b16 %v96
    %v393 = vunpack.c.h.b16 %v96
    %v394 = vunpack.c.l.b16 %v97
    %v395 = vunpack.c.h.b16 %v97
    %v396 = vunpack.c.l.b16 %v98
    %v397 = vunpack.c.h.b16 %v98
    %v398 = vunpack.c.l.b16 %v99
    %v399 = vunpack.c.h.b16 %v99
    %v400 = vunpack.c.l.b16 %v100
    %v401 = vunpack.c.h.b16 %v100
    %v402 = vunpack.c.l.b16 %v101
    %v403 = vunpack.c.h.b16 %v101
    %v404 = vunpack.c.l.b16 %v102
    %v405 = vunpack.c.h.b16 %v102
    %v406 = vunpack.c.l.b16 %v103
    %v407 = vunpack.c.h.b16 %v103
    %v408 = vunpack.c.l.b16 %v104
    %v409 = vunpack.c.h.b16 %v104
    %v410 = vunpack.c.l.b16 %v105
    %v411 = vunpack.c.h.b16 %v105
    %v412 = vunpack.c.l.b16 %v106
    %v413 = vunpack.c.h.b16 %v106
    %v414 = vunpack.c.l.b16 %v107
    %v415 = vunpack.c.h.b16 %v107
    %v416 = vunpack.c.l.b16 %v108
    %v417 = vunpack.c.h.b16 %v108
    %v418 = vunpack.c.l.b16 %v109
    %v419 = vunpack.c.h.b16 %v109
    %v420 = vunpack.c.l.b16 %v110
    %v421 = vunpack.c.h.b16 %v110
    %v422 = vunpack.c.l.b16 %v111
    %v423 = vunpack.c.h.b16 %v111
    %v424 = vunpack.c.l.b16 %v112
    %v425 = vunpack.c.h.b16 %v112
    %v426 = vunpack.c.l.b16 %v113
    %v427 = vunpack.c.h.b16 %v113
    %v428 = vunpack.c.l.b16 %v114
    %v429 = vunpack.c.h.b16 %v114
    %v430 = vunpack.c.l.b16 %v115
    %v431 = vunpack.c.h.b16 %v115
    %v432 = vunpack.c.l.b16 %v116
    %v433 = vunpack.c.h.b16 %v116
    %v434 = vunpack.c.l.b16 %v117
    %v435 = vunpack.c.h.b16 %v117
    %v436 = vunpack.c.l.b16 %v118
    %v437 = vunpack.c.h.b16 %v118
    %v438 = vunpack.c.l.b16 %v119
    %v439 = vunpack.c.h.b16 %v119
    %v440 = vunpack.c.l.b16 %v120
    %v441 = vunpack.c.h.b16 %v120
    %v442 = vunpack.c.l.b16 %v121
    %v443 = vunpack.c.h.b16 %v121
    %v444 = vunpack.c.l.b16 %v122
    %v445 = vunpack.c.h.b16 %v122
    %v446 = vunpack.c.l.b16 %v123
    %v447 = vunpack.c.h.b16 %v123
    %v448 = vunpack.c.l.b16 %v124
    %v449 = vunpack.c.h.b16 %v124
    %v450 = vunpack.c.l.b16 %v125
    %v451 = vunpack.c.h.b16 %v125
    %v452 = vunpack.c.l.b16 %v126
    %v453 = vunpack.c.h.b16 %v126
    %v454 = vunpack.c.l.b16 %v127
    %v455 = vunpack.c.h.b16 %v127
    %v456 = vunpack.c.l.b16 %v128
    %v457 = vunpack.c.h.b16 %v128
    %v458 = vunpack.c.l.b16 %v129
    %v459 = vunpack.c.h.b16 %v129
    %v460 = vpack.c.b16 %v266, %v264
    %v461 = vpack.c.b16 %v267, %v265
    %v462 = vpack.c.b16 %v270, %v268
    %v463 = vpack.c.b16 %v271, %v269
    %v464 = vpack.c.b16 %v274, %v272
    %v465 = vpack.c.b16 %v275, %v273
    %v466 = vpack.c.b16 %v278, %v276
    %v467 = vpack.c.b16 %v279, %v277
    %v468 = vpack.c.b16 %v282, %v280
    %v469 = vpack.c.b16 %v283, %v281
    %v470 = vpack.c.b16 %v286, %v284
    %v471 = vpack.c.b16 %v287, %v285
    %v472 = vpack.c.b16 %v290, %v288
    %v473 = vpack.c.b16 %v291, %v289
    %v474 = vpack.c.b16 %v294, %v292
    %v475 = vpack.c.b16 %v295, %v293
    %v476 = vpack.c.b16 %v298, %v296
    %v477 = vpack.c.b16 %v299, %v297
    %v478 = vpack.c.b16 %v302, %v300
    %v479 = vpack.c.b16 %v303, %v301
    %v480 = vpack.c.b16 %v306, %v304
    %v481 = vpack.c.b16 %v307, %v305
    %v482 = vpack.c.b16 %v310, %v308
    %v483 = vpack.c.b16 %v311, %v309
    %v484 = vpack.c.b16 %v314, %v312
    %v485 = vpack.c.b16 %v315, %v313
    %v486 = vpack.c.b16 %v318, %v316
    %v487 = vpack.c.b16 %v319, %v317
    %v488 = vpack.c.b16 %v322, %v320
    %v489 = vpack.c.b16 %v323, %v321
    %v490 = vpack.c.b16 %v326, %v324
    %v491 = vpack.c.b16 %v327, %v325
    %v492 = vpack.c.b16 %v330, %v328
    %v493 = vpack.c.b16 %v331, %v329
    %v494 = vpack.c.b16 %v334, %v332
    %v495 = vpack.c.b16 %v335, %v333
    %v496 = vpack.c.b16 %v338, %v336
    %v497 = vpack.c.b16 %v339, %v337
    %v498 = vpack.c.b16 %v342, %v340
    %v499 = vpack.c.b16 %v343, %v341
    %v500 = vpack.c.b16 %v346, %v344
    %v501 = vpack.c.b16 %v347, %v345
    %v502 = vpack.c.b16 %v350, %v348
    %v503 = vpack.c.b16 %v351, %v349
    %v504 = vpack.c.b16 %v354, %v352
    %v505 = vpack.c.b16 %v355, %v353
    %v506 = vpack.c.b16 %v358, %v356
    %v507 = vpack.c.b16 %v359, %v357
    %v508 = vpack.c.b16 %v362, %v360
    %v509 = vpack.c.b16 %v363, %v361
    %v510 = vpack.c.b16 %v366, %v364
    %v511 = vpack.c.b16 %v367, %v365
    %v512 = vpack.c.b16 %v370, %v368
    %v513 = vpack.c.b16 %v371, %v369
    %v514 = vpack.c.b16 %v374, %v372
    %v515 = vpack.c.b16 %v375, %v373
    %v516 = vpack.c.b16 %v378, %v376
    %v517 = vpack.c.b16 %v379, %v377
    %v518 = vpack.c.b16 %v382, %v380
    %v519 = vpack.c.b16 %v383, %v381
    %v520 = vpack.c.b16 %v386, %v384
    %v521 = vpack.c.b16 %v387, %v385
    %v522 = vpack.c.b16 %v390, %v388
    %v523 = vpack.c.b16 %v391, %v389
    %v524 = vpack.c.b16 %v394, %v392
    %v525 = vpack.c.b16 %v395, %v393
    %v526 = vpack.c.b16 %v398, %v396
    %v527 = vpack.c.b16 %v399, %v397
    %v528 = vpack.c.b16 %v402, %v400
    %v529 = vpack.c.b16 %v403, %v401
    %v530 = vpack.c.b16 %v406, %v404
    %v531 = vpack.c.b16 %v407, %v405
    %v532 = vpack.c.b16 %v410, %v408
    %v533 = vpack.c.b16 %v411, %v409
    %v534 = vpack.c.b16 %v414, %v412
    %v535 = vpack.c.b16 %v415, %v413
    %v536 = vpack.c.b16 %v418, %v416
    %v537 = vpack.c.b16 %v419, %v417
    %v538 = vpack.c.b16 %v422, %v420
    %v539 = vpack.c.b16 %v423, %v421
    %v540 = vpack.c.b16 %v426, %v424
    %v541 = vpack.c.b16 %v427, %v425
    %v542 = vpack.c.b16 %v430, %v428
    %v543 = vpack.c.b16 %v431, %v429
    %v544 = vpack.c.b16 %v434, %v432
    %v545 = vpack.c.b16 %v435, %v433
    %v546 = vpack.c.b16 %v438, %v436
    %v547 = vpack.c.b16 %v439, %v437
    %v548 = vpack.c.b16 %v442, %v440
    %v549 = vpack.c.b16 %v443, %v441
    %v550 = vpack.c.b16 %v446, %v444
    %v551 = vpack.c.b16 %v447, %v445
    %v552 = vpack.c.b16 %v450, %v448
    %v553 = vpack.c.b16 %v451, %v449
    %v554 = vpack.c.b16 %v454, %v452
    %v555 = vpack.c.b16 %v455, %v453
    %v556 = vpack.c.b16 %v458, %v456
    %v557 = vpack.c.b16 %v459, %v457
    %vm656 = vcmask 130048
    %v658 = vsel %vm656, %v159, 0
    %660 = vmatprep.subr.bf16.mxu0 %v475
    %661 = vmatpush1.bf16.msra.mxu0 %v474
    %662 = vmatprep.subr.bf16.mxu0 %v473
    %663 = vmatpush1.bf16.msra.mxu0 %v472
    %664 = vmatprep.subr.bf16.mxu0 %v471
    %665 = vmatpush1.bf16.msra.mxu0 %v470
    %666 = vmatprep.subr.bf16.mxu0 %v469
    %667 = vmatpush1.bf16.msra.mxu0 %v468
    %668 = vmatprep.subr.bf16.mxu0 %v467
    %669 = vmatpush1.bf16.msra.mxu0 %v466
    %670 = vmatprep.subr.bf16.mxu0 %v465
    %671 = vmatpush1.bf16.msra.mxu0 %v464
    %672 = vmatprep.subr.bf16.mxu0 %v463
    %673 = vmatpush1.bf16.msra.mxu0 %v462
    %674 = vmatprep.subr.bf16.mxu0 %v461
    %675 = vmatpush1.bf16.msra.mxu0 %v460
    %676 = vmatprep.subr.bf16.mxu0 %v491
    %677 = vmatpush2.bf16.msra.mxu0 %v490
    %678 = vmatprep.subr.bf16.mxu0 %v489
    %679 = vmatpush2.bf16.msra.mxu0 %v488
    %680 = vmatprep.subr.bf16.mxu0 %v487
    %681 = vmatpush2.bf16.msra.mxu0 %v486
    %682 = vmatprep.subr.bf16.mxu0 %v485
    %683 = vmatpush2.bf16.msra.mxu0 %v484
    %684 = vmatprep.subr.bf16.mxu0 %v483
    %685 = vmatpush2.bf16.msra.mxu0 %v482
    %686 = vmatprep.subr.bf16.mxu0 %v481
    %687 = vmatpush2.bf16.msra.mxu0 %v480
    %688 = vmatprep.subr.bf16.mxu0 %v479
    %689 = vmatpush2.bf16.msra.mxu0 %v478
    %690 = vmatprep.subr.bf16.mxu0 %v477
    %691 = vmatpush2.bf16.msra.mxu0 %v476
    %692 = vmatprep.mubr.bf16.mxu0 %v154
    %693 = vmatmul.mubr.bf16.gmra.mxu0 %v153
    %v694 = vpop.f32.mrf.mxu0
    %v695 = vadd.f32 %v135, %v694
    %v696 = vpop.f32.mrf.mxu0
    %v697 = vadd.f32 %v139, %v696
    %v698 = vpop.f32.mrf.mxu0
    %v699 = vpop.f32.mrf.mxu0
    %700 = vdwg.mxu0
    %701 = vmatprep.subr.bf16.mxu0 %v507
    %702 = vmatpush1.bf16.msra.mxu0 %v506
    %703 = vmatprep.subr.bf16.mxu0 %v505
    %704 = vmatpush1.bf16.msra.mxu0 %v504
    %705 = vmatprep.subr.bf16.mxu0 %v503
    %706 = vmatpush1.bf16.msra.mxu0 %v502
    %707 = vmatprep.subr.bf16.mxu0 %v501
    %708 = vmatpush1.bf16.msra.mxu0 %v500
    %709 = vmatprep.subr.bf16.mxu0 %v499
    %710 = vmatpush1.bf16.msra.mxu0 %v498
    %711 = vmatprep.subr.bf16.mxu0 %v497
    %712 = vmatpush1.bf16.msra.mxu0 %v496
    %713 = vmatprep.subr.bf16.mxu0 %v495
    %714 = vmatpush1.bf16.msra.mxu0 %v494
    %715 = vmatprep.subr.bf16.mxu0 %v493
    %716 = vmatpush1.bf16.msra.mxu0 %v492
    %717 = vmatprep.subr.bf16.mxu0 %v523
    %718 = vmatpush2.bf16.msra.mxu0 %v522
    %719 = vmatprep.subr.bf16.mxu0 %v521
    %720 = vmatpush2.bf16.msra.mxu0 %v520
    %721 = vmatprep.subr.bf16.mxu0 %v519
    %722 = vmatpush2.bf16.msra.mxu0 %v518
    %723 = vmatprep.subr.bf16.mxu0 %v517
    %724 = vmatpush2.bf16.msra.mxu0 %v516
    %725 = vmatprep.subr.bf16.mxu0 %v515
    %726 = vmatpush2.bf16.msra.mxu0 %v514
    %727 = vmatprep.subr.bf16.mxu0 %v513
    %728 = vmatpush2.bf16.msra.mxu0 %v512
    %729 = vmatprep.subr.bf16.mxu0 %v511
    %730 = vmatpush2.bf16.msra.mxu0 %v510
    %731 = vmatprep.subr.bf16.mxu0 %v509
    %732 = vmatpush2.bf16.msra.mxu0 %v508
    %733 = vmatprep.mubr.bf16.mxu0 %v156
    %734 = vmatmul.mubr.bf16.gmra.mxu0 %v155
    %v735 = vpop.f32.mrf.mxu0
    %v736 = vadd.f32 %v695, %v735
    %v737 = vpop.f32.mrf.mxu0
    %v738 = vadd.f32 %v697, %v737
    %v739 = vpop.f32.mrf.mxu0
    %v740 = vpop.f32.mrf.mxu0
    %741 = vdwg.mxu0
    %742 = vmatprep.subr.bf16.mxu0 %v539
    %743 = vmatpush1.bf16.msra.mxu0 %v538
    %744 = vmatprep.subr.bf16.mxu0 %v537
    %745 = vmatpush1.bf16.msra.mxu0 %v536
    %746 = vmatprep.subr.bf16.mxu0 %v535
    %747 = vmatpush1.bf16.msra.mxu0 %v534
    %748 = vmatprep.subr.bf16.mxu0 %v533
    %749 = vmatpush1.bf16.msra.mxu0 %v532
    %750 = vmatprep.subr.bf16.mxu0 %v531
    %751 = vmatpush1.bf16.msra.mxu0 %v530
    %752 = vmatprep.subr.bf16.mxu0 %v529
    %753 = vmatpush1.bf16.msra.mxu0 %v528
    %754 = vmatprep.subr.bf16.mxu0 %v527
    %755 = vmatpush1.bf16.msra.mxu0 %v526
    %756 = vmatprep.subr.bf16.mxu0 %v525
    %757 = vmatpush1.bf16.msra.mxu0 %v524
    %758 = vmatprep.subr.bf16.mxu0 %v555
    %759 = vmatpush2.bf16.msra.mxu0 %v554
    %760 = vmatprep.subr.bf16.mxu0 %v553
    %761 = vmatpush2.bf16.msra.mxu0 %v552
    %762 = vmatprep.subr.bf16.mxu0 %v551
    %763 = vmatpush2.bf16.msra.mxu0 %v550
    %764 = vmatprep.subr.bf16.mxu0 %v549
    %765 = vmatpush2.bf16.msra.mxu0 %v548
    %766 = vmatprep.subr.bf16.mxu0 %v547
    %767 = vmatpush2.bf16.msra.mxu0 %v546
    %768 = vmatprep.subr.bf16.mxu0 %v545
    %769 = vmatpush2.bf16.msra.mxu0 %v544
    %770 = vmatprep.subr.bf16.mxu0 %v543
    %771 = vmatpush2.bf16.msra.mxu0 %v542
    %772 = vmatprep.subr.bf16.mxu0 %v541
    %773 = vmatpush2.bf16.msra.mxu0 %v540
    %774 = vmatprep.mubr.bf16.mxu0 %v158
    %775 = vmatmul.mubr.bf16.gmra.mxu0 %v157
    %v776 = vpop.f32.mrf.mxu0
    %v777 = vadd.f32 %v736, %v776
    %v778 = vpop.f32.mrf.mxu0
    %v779 = vadd.f32 %v738, %v778
    %v780 = vpop.f32.mrf.mxu0
    %v781 = vpop.f32.mrf.mxu0
    %782 = vdwg.mxu0
    %783 = vmatprep.subr.bf16.mxu0 0
    %784 = vmatpush1.bf16.msra.mxu0 0
    %785 = vmatprep.subr.bf16.mxu0 0
    %786 = vmatpush1.bf16.msra.mxu0 0
    %787 = vmatprep.subr.bf16.mxu0 0
    %788 = vmatpush1.bf16.msra.mxu0 0
    %789 = vmatprep.subr.bf16.mxu0 0
    %790 = vmatpush1.bf16.msra.mxu0 0
    %791 = vmatprep.subr.bf16.mxu0 0
    %792 = vmatpush1.bf16.msra.mxu0 0
    %793 = vmatprep.subr.bf16.mxu0 0
    %794 = vmatpush1.bf16.msra.mxu0 0
    %795 = vmatprep.subr.bf16.mxu0 0
    %796 = vmatpush1.bf16.msra.mxu0 0
    %797 = vmatprep.subr.bf16.mxu0 %v557
    %798 = vmatpush1.bf16.msra.mxu0 %v556
    %799 = vmatprep.subr.bf16.mxu0 0
    %800 = vmatpush2.bf16.msra.mxu0 0
    %801 = vmatprep.subr.bf16.mxu0 0
    %802 = vmatpush2.bf16.msra.mxu0 0
    %803 = vmatprep.subr.bf16.mxu0 0
    %804 = vmatpush2.bf16.msra.mxu0 0
    %805 = vmatprep.subr.bf16.mxu0 0
    %806 = vmatpush2.bf16.msra.mxu0 0
    %807 = vmatprep.subr.bf16.mxu0 0
    %808 = vmatpush2.bf16.msra.mxu0 0
    %809 = vmatprep.subr.bf16.mxu0 0
    %810 = vmatpush2.bf16.msra.mxu0 0
    %811 = vmatprep.subr.bf16.mxu0 0
    %812 = vmatpush2.bf16.msra.mxu0 0
    %813 = vmatprep.subr.bf16.mxu0 0
    %814 = vmatpush2.bf16.msra.mxu0 0
    %815 = vmatprep.mubr.bf16.mxu0 0
    %816 = vmatmul.mubr.bf16.gmra.mxu0 %v658
    %v817 = vpop.f32.mrf.mxu0
    %v818 = vadd.f32 %v777, %v817
    %v819 = vpop.f32.mrf.mxu0
    %v820 = vadd.f32 %v779, %v819
    %v821 = vpop.f32.mrf.mxu0
    %v822 = vpop.f32.mrf.mxu0
    %823 = vdwg.mxu0
    %v824 = vmax.f32 %v818, 0.0
    %v825 = vmax.f32 %v820, 0.0
    %v826 = vpack.c.bf16 %v824, %v824
    %v827 = vpack.c.bf16 %v825, %v825
    %v828 = vld [vmem:[%s3] sm:$0xf]
    %v829 = vld [vmem:[%s3 + $0x4] sm:$0xf]
    %v830 = vld [vmem:[%s3 + $0x8] sm:$0xf]
    %v831 = vld [vmem:[%s3 + $0xc] sm:$0xf]
    %v832 = vld [vmem:[%s3 + $0x10] sm:$0xf]
    %v833 = vld [vmem:[%s3 + $0x14] sm:$0xf]
    %v834 = vld [vmem:[%s3 + $0x18] sm:$0xf]
    %v835 = vld [vmem:[%s3 + $0x1c] sm:$0xf]
    %v836 = vld [vmem:[%s3 + $0x20] sm:$0xf]
    %v837 = vld [vmem:[%s3 + $0x24] sm:$0xf]
    %v838 = vld [vmem:[%s3 + $0x28] sm:$0xf]
    %v839 = vld [vmem:[%s3 + $0x2c] sm:$0xf]
    %v840 = vld [vmem:[%s3 + $0x30] sm:$0xf]
    %v841 = vld [vmem:[%s3 + $0x34] sm:$0xf]
    %v842 = vld [vmem:[%s3 + $0x38] sm:$0xf]
    %v843 = vld [vmem:[%s3 + $0x3c] sm:$0xf]
    %v844 = vld [vmem:[%s3 + $0x40] sm:$0xf]
    %v845 = vld [vmem:[%s3 + $0x44] sm:$0xf]
    %v846 = vld [vmem:[%s3 + $0x48] sm:$0xf]
    %v847 = vld [vmem:[%s3 + $0x4c] sm:$0xf]
    %v848 = vld [vmem:[%s3 + $0x50] sm:$0xf]
    %v849 = vld [vmem:[%s3 + $0x54] sm:$0xf]
    %v850 = vld [vmem:[%s3 + $0x58] sm:$0xf]
    %v851 = vld [vmem:[%s3 + $0x5c] sm:$0xf]
    %v852 = vld [vmem:[%s3 + $0x60] sm:$0xf]
    %v853 = vld [vmem:[%s3 + $0x64] sm:$0xf]
    %v854 = vld [vmem:[%s3 + $0x68] sm:$0xf]
    %v855 = vld [vmem:[%s3 + $0x6c] sm:$0xf]
    %v856 = vld [vmem:[%s3 + $0x70] sm:$0xf]
    %v857 = vld [vmem:[%s3 + $0x74] sm:$0xf]
    %v858 = vld [vmem:[%s3 + $0x78] sm:$0xf]
    %v859 = vld [vmem:[%s3 + $0x7c] sm:$0xf]
    %v860 = vld [vmem:[%s4] sm:$0x1]
    %v862 = vlaneseq
    %v863 = vshrl.u32 %v862, 7
    %v864 = vsub.s32 0, %v863
    %v865 = vrot.slane %v860, %v864
    %v899 = vunpack.c.l.b16 %v828
    %v900 = vunpack.c.l.b16 %v829
    %v901 = vunpack.c.l.b16 %v830
    %v902 = vunpack.c.l.b16 %v831
    %v903 = vunpack.c.l.b16 %v832
    %v904 = vunpack.c.l.b16 %v833
    %v905 = vunpack.c.l.b16 %v834
    %v906 = vunpack.c.l.b16 %v835
    %v907 = vunpack.c.l.b16 %v836
    %v908 = vunpack.c.l.b16 %v837
    %v909 = vunpack.c.l.b16 %v838
    %v910 = vunpack.c.l.b16 %v839
    %v911 = vunpack.c.l.b16 %v840
    %v912 = vunpack.c.l.b16 %v841
    %v913 = vunpack.c.l.b16 %v842
    %v914 = vunpack.c.l.b16 %v843
    %v915 = vunpack.c.l.b16 %v844
    %v916 = vunpack.c.l.b16 %v845
    %v917 = vunpack.c.l.b16 %v846
    %v918 = vunpack.c.l.b16 %v847
    %v919 = vunpack.c.l.b16 %v848
    %v920 = vunpack.c.l.b16 %v849
    %v921 = vunpack.c.l.b16 %v850
    %v922 = vunpack.c.l.b16 %v851
    %v923 = vunpack.c.l.b16 %v852
    %v924 = vunpack.c.l.b16 %v853
    %v925 = vunpack.c.l.b16 %v854
    %v926 = vunpack.c.l.b16 %v855
    %v927 = vunpack.c.l.b16 %v856
    %v928 = vunpack.c.l.b16 %v857
    %v929 = vunpack.c.l.b16 %v858
    %v930 = vunpack.c.l.b16 %v859
    %v931 = vpack.c.b16 %v900, %v899
    %v932 = vpack.c.b16 %v902, %v901
    %v933 = vpack.c.b16 %v904, %v903
    %v934 = vpack.c.b16 %v906, %v905
    %v935 = vpack.c.b16 %v908, %v907
    %v936 = vpack.c.b16 %v910, %v909
    %v937 = vpack.c.b16 %v912, %v911
    %v938 = vpack.c.b16 %v914, %v913
    %v939 = vpack.c.b16 %v916, %v915
    %v940 = vpack.c.b16 %v918, %v917
    %v941 = vpack.c.b16 %v920, %v919
    %v942 = vpack.c.b16 %v922, %v921
    %v943 = vpack.c.b16 %v924, %v923
    %v944 = vpack.c.b16 %v926, %v925
    %v945 = vpack.c.b16 %v928, %v927
    %v946 = vpack.c.b16 %v930, %v929
    %963 = vmatprep.subr.bf16.mxu0 0
    %964 = vmatpush1.bf16.msra.mxu0 %v938
    %965 = vmatprep.subr.bf16.mxu0 0
    %966 = vmatpush1.bf16.msra.mxu0 %v937
    %967 = vmatprep.subr.bf16.mxu0 0
    %968 = vmatpush1.bf16.msra.mxu0 %v936
    %969 = vmatprep.subr.bf16.mxu0 0
    %970 = vmatpush1.bf16.msra.mxu0 %v935
    %971 = vmatprep.subr.bf16.mxu0 0
    %972 = vmatpush1.bf16.msra.mxu0 %v934
    %973 = vmatprep.subr.bf16.mxu0 0
    %974 = vmatpush1.bf16.msra.mxu0 %v933
    %975 = vmatprep.subr.bf16.mxu0 0
    %976 = vmatpush1.bf16.msra.mxu0 %v932
    %977 = vmatprep.subr.bf16.mxu0 0
    %978 = vmatpush1.bf16.msra.mxu0 %v931
    %979 = vmatprep.subr.bf16.mxu0 0
    %980 = vmatpush2.bf16.msra.mxu0 %v946
    %981 = vmatprep.subr.bf16.mxu0 0
    %982 = vmatpush2.bf16.msra.mxu0 %v945
    %983 = vmatprep.subr.bf16.mxu0 0
    %984 = vmatpush2.bf16.msra.mxu0 %v944
    %985 = vmatprep.subr.bf16.mxu0 0
    %986 = vmatpush2.bf16.msra.mxu0 %v943
    %987 = vmatprep.subr.bf16.mxu0 0
    %988 = vmatpush2.bf16.msra.mxu0 %v942
    %989 = vmatprep.subr.bf16.mxu0 0
    %990 = vmatpush2.bf16.msra.mxu0 %v941
    %991 = vmatprep.subr.bf16.mxu0 0
    %992 = vmatpush2.bf16.msra.mxu0 %v940
    %993 = vmatprep.subr.bf16.mxu0 0
    %994 = vmatpush2.bf16.msra.mxu0 %v939
    %995 = vmatprep.mubr.bf16.mxu0 %v827
    %996 = vmatmul.mubr.bf16.gmra.mxu0 %v826
    %v997 = vpop.f32.mrf.mxu0
    %v998 = vadd.f32 %v865, %v997
    %v999 = vpop.f32.mrf.mxu0
    %v1000 = vpop.f32.mrf.mxu0
    %v1001 = vpop.f32.mrf.mxu0
    %1002 = vdwg.mxu0
    %v1003 = vmax.f32 %v998, 0.0
    %v1004 = vpack.c.bf16 %v1003, %v1003
    %v1005 = vld [vmem:[%s5] sm:$0xf]
    %v1006 = vld [vmem:[%s5 + $0x4] sm:$0xf]
    %v1007 = vld [vmem:[%s5 + $0x8] sm:$0xf]
    %v1008 = vld [vmem:[%s5 + $0xc] sm:$0xf]
    %v1009 = vld [vmem:[%s5 + $0x10] sm:$0xf]
    %v1010 = vld [vmem:[%s5 + $0x14] sm:$0xf]
    %v1011 = vld [vmem:[%s5 + $0x18] sm:$0xf]
    %v1012 = vld [vmem:[%s5 + $0x1c] sm:$0xf]
    %v1013 = vld [vmem:[%s5 + $0x20] sm:$0xf]
    %v1014 = vld [vmem:[%s5 + $0x24] sm:$0xf]
    %v1015 = vld [vmem:[%s5 + $0x28] sm:$0xf]
    %v1016 = vld [vmem:[%s5 + $0x2c] sm:$0xf]
    %v1017 = vld [vmem:[%s5 + $0x30] sm:$0xf]
    %v1018 = vld [vmem:[%s5 + $0x34] sm:$0xf]
    %v1019 = vld [vmem:[%s5 + $0x38] sm:$0xf]
    %v1020 = vld [vmem:[%s5 + $0x3c] sm:$0xf]
    %v1021 = vld [vmem:[%s6] sm:$0x1]
    %v1023 = vlaneseq
    %v1024 = vshrl.u32 %v1023, 7
    %v1025 = vsub.s32 0, %v1024
    %v1026 = vrot.slane %v1021, %v1025
    %v1044 = vunpack.c.l.b16 %v1005
    %v1045 = vunpack.c.l.b16 %v1006
    %v1046 = vunpack.c.l.b16 %v1007
    %v1047 = vunpack.c.l.b16 %v1008
    %v1048 = vunpack.c.l.b16 %v1009
    %v1049 = vunpack.c.l.b16 %v1010
    %v1050 = vunpack.c.l.b16 %v1011
    %v1051 = vunpack.c.l.b16 %v1012
    %v1052 = vunpack.c.l.b16 %v1013
    %v1053 = vunpack.c.l.b16 %v1014
    %v1054 = vunpack.c.l.b16 %v1015
    %v1055 = vunpack.c.l.b16 %v1016
    %v1056 = vunpack.c.l.b16 %v1017
    %v1057 = vunpack.c.l.b16 %v1018
    %v1058 = vunpack.c.l.b16 %v1019
    %v1059 = vunpack.c.l.b16 %v1020
    %v1060 = vpack.c.b16 %v1045, %v1044
    %v1061 = vpack.c.b16 %v1047, %v1046
    %v1062 = vpack.c.b16 %v1049, %v1048
    %v1063 = vpack.c.b16 %v1051, %v1050
    %v1064 = vpack.c.b16 %v1053, %v1052
    %v1065 = vpack.c.b16 %v1055, %v1054
    %v1066 = vpack.c.b16 %v1057, %v1056
    %v1067 = vpack.c.b16 %v1059, %v1058
    %1076 = vmatprep.subr.bf16.mxu0 0
    %1077 = vmatpush1.bf16.msra.mxu0 %v1067
    %1078 = vmatprep.subr.bf16.mxu0 0
    %1079 = vmatpush1.bf16.msra.mxu0 %v1066
    %1080 = vmatprep.subr.bf16.mxu0 0
    %1081 = vmatpush1.bf16.msra.mxu0 %v1065
    %1082 = vmatprep.subr.bf16.mxu0 0
    %1083 = vmatpush1.bf16.msra.mxu0 %v1064
    %1084 = vmatprep.subr.bf16.mxu0 0
    %1085 = vmatpush1.bf16.msra.mxu0 %v1063
    %1086 = vmatprep.subr.bf16.mxu0 0
    %1087 = vmatpush1.bf16.msra.mxu0 %v1062
    %1088 = vmatprep.subr.bf16.mxu0 0
    %1089 = vmatpush1.bf16.msra.mxu0 %v1061
    %1090 = vmatprep.subr.bf16.mxu0 0
    %1091 = vmatpush1.bf16.msra.mxu0 %v1060
    %1092 = vmatprep.subr.bf16.mxu0 0
    %1093 = vmatpush2.bf16.msra.mxu0 0
    %1094 = vmatprep.subr.bf16.mxu0 0
    %1095 = vmatpush2.bf16.msra.mxu0 0
    %1096 = vmatprep.subr.bf16.mxu0 0
    %1097 = vmatpush2.bf16.msra.mxu0 0
    %1098 = vmatprep.subr.bf16.mxu0 0
    %1099 = vmatpush2.bf16.msra.mxu0 0
    %1100 = vmatprep.subr.bf16.mxu0 0
    %1101 = vmatpush2.bf16.msra.mxu0 0
    %1102 = vmatprep.subr.bf16.mxu0 0
    %1103 = vmatpush2.bf16.msra.mxu0 0
    %1104 = vmatprep.subr.bf16.mxu0 0
    %1105 = vmatpush2.bf16.msra.mxu0 0
    %1106 = vmatprep.subr.bf16.mxu0 0
    %1107 = vmatpush2.bf16.msra.mxu0 0
    %1108 = vmatprep.mubr.bf16.mxu0 0
    %1109 = vmatmul.mubr.bf16.gmra.mxu0 %v1004
    %v1110 = vpop.f32.mrf.mxu0
    %v1111 = vadd.f32 %v1026, %v1110
    %v1112 = vpop.f32.mrf.mxu0
    %v1113 = vpop.f32.mrf.mxu0
    %v1114 = vpop.f32.mrf.mxu0
    %1115 = vdwg.mxu0
    %1116 = vst [vmem:[#allocation2] sm:$0xff] %v1111
    // Predicated region
    $region30: #{simple_nn_forward.1} parent=1 // pred_check
      _
    $region31: #{simple_nn_forward.1} parent=1 // pred_check_branch
      %1118 = sbr.rel (0) target = $region33
    $region32: #{simple_nn_forward.1} parent=1 // pred_region
      %s1120 = ssub.s32 128, 128
      %1121 = vsyncadd [#allocation3], %s1120
      %s1123 = sshll.u32 [#allocation2], 4
      %s1124 = int_to_ptr.vmem [resolvable:$true] %s1123
      %1126 = dma.vmem_to_hbm [thread:$0]  %s1124, 128, %s7, [#allocation3]
    $region33: #{simple_nn_forward.1} parent=1 // pred_fallthru
      _
    // Predicated region
    $region34: #{simple_nn_forward.1} parent=1 // pred_check
      _
    $region35: #{simple_nn_forward.1} parent=1 // pred_check_branch
      %1128 = sbr.rel (0) target = $region37
    $region36: #{simple_nn_forward.1} parent=1 // pred_region
      %1129 = dma.done [#allocation3], 128
    $region37: #{simple_nn_forward.1} parent=1 // pred_fallthru
      _
    %1130 = vsyncpa [#allocation3], 1

</llo_original>
